<compile_context>
chip_gen: v6e
topology: v6e:2x2x1
jax: 0.10.0
libtpu: 0.0.40
codegen_flags: <defaults>
</compile_context>

<pallas_src>
import functools

import jax
import jax.numpy as jnp
from jax import lax
from jax.experimental import pallas as pl
from jax.experimental.pallas import tpu as pltpu


# ------------------------- helpers -------------------------

def _round_up(x: int, m: int) -> int:
    return ((x + m - 1) // m) * m


def _cdiv(a: int, b: int) -> int:
    return (a + b - 1) // b


def _vmem_capacity_bytes() -> int:
    try:
        info = pltpu.get_tpu_info()
        cap = getattr(info, "vmem_capacity_bytes", None)
        if cap:
            return int(cap)
    except Exception:
        pass
    return 64 * 1024 * 1024  # conservative fallback (v7x per-TC VMEM)


def _vmem_limit_bytes() -> int:
    cap = _vmem_capacity_bytes()
    if cap >= 128 * 1024 * 1024:          # v5e / v6e: 128 MiB physical
        return 64 * 1024 * 1024
    return min(48 * 1024 * 1024, (cap * 3) // 4)   # v7x: keep <= ~48 MiB


_MAX_PACKED_ROWS = 8192    # small-L packed path: 4 MiB / input / step (f32)
_MAX_LANES = 32768         # transpose-fallback path
_MAX_ROWS = 4096           # large-L rows path


# ------------------------- kernels -------------------------

def _liou_kernel_packed(p_ref, g_ref, s_ref, o_ref, *, two_r, l_size, precision):
    """128 % L == 0 path.  Refs are (TR, 128); each row packs 128//L length-L
    original rows.  s_ref is a constant (128, 128//L) block-diagonal 0/1
    matrix; the per-group segmented sums are two MXU matmuls."""
    diff = jnp.abs(p_ref[...] - g_ref[...])              # (TR, 128), input dtype
    o_term = jnp.abs(two_r - diff)
    seg = s_ref[...]                                      # (128, G)
    s_o = jnp.dot(o_term, seg, preferred_element_type=jnp.float32,
                  precision=precision)                    # (TR, G) f32
    s_d = jnp.dot(diff, seg, preferred_element_type=jnp.float32,
                  precision=precision)
    s_u = s_d + two_r * l_size
    o_ref[...] = (1.0 - s_o / s_u).astype(o_ref.dtype)


def _liou_kernel_lanes(p_ref, g_ref, o_ref, *, two_r, l_size):
    """Transpose fallback (L does not divide 128): refs are (L, TM); reduce
    over sublanes (axis 0), lane-dense (1, TM) output."""
    diff = jnp.abs(p_ref[...] - g_ref[...])                               # (L, TM)
    s_o = jnp.sum(jnp.abs(two_r - diff), axis=0, keepdims=True, dtype=jnp.float32)
    s_d = jnp.sum(diff, axis=0, keepdims=True, dtype=jnp.float32)
    s_u = s_d + two_r * l_size
    o_ref[...] = (1.0 - s_o / s_u).astype(o_ref.dtype)


def _liou_kernel_rows(p_ref, g_ref, o_ref, so_ref, sd_ref, *,
                      two_r, l_total, l_tile, ragged):
    """L >= 128 path: refs are (TM, TL); grid is (m_tiles, l_tiles) with the
    L axis "arbitrary"; partial sums accumulate in f32 VMEM scratch."""
    li = pl.program_id(1)

    @pl.when(li == 0)
    def _():
        so_ref[...] = jnp.zeros_like(so_ref)
        sd_ref[...] = jnp.zeros_like(sd_ref)

    diff = jnp.abs(p_ref[...] - g_ref[...])               # (TM, TL), input dtype
    o_term = jnp.abs(two_r - diff)
    if ragged:
        # Last L block is partial: mask garbage lanes out of the reduction.
        col = li * l_tile + lax.broadcasted_iota(jnp.int32, diff.shape, 1)
        valid = col < l_total
        diff = jnp.where(valid, diff, 0)
        o_term = jnp.where(valid, o_term, 0)
    so_ref[...] += jnp.sum(o_term, axis=1, keepdims=True, dtype=jnp.float32)
    sd_ref[...] += jnp.sum(diff, axis=1, keepdims=True, dtype=jnp.float32)

    @pl.when(li == pl.num_programs(1) - 1)
    def _():
        s_u = sd_ref[...] + two_r * l_total
        o_ref[...] = (1.0 - so_ref[...] / s_u).astype(o_ref.dtype)


# ------------------------- per-path wrappers -------------------------

def _liou_small_packed(p2, g2, two_r, M, L, itemsize, budget, vmem_limit, cost):
    dtype = p2.dtype
    G = 128 // L
    m_pad = _round_up(M, G)
    if m_pad != M:
        # Tail is smaller than one packed 128-lane row.
        # TODO(synk): split the <G-row tail off instead of padding the whole
        # array when this shows up in profiles (pad is a full HBM copy).
        p2 = jnp.pad(p2, ((0, m_pad - M), (0, 0)))
        g2 = jnp.pad(g2, ((0, m_pad - M), (0, 0)))
    MR = (m_pad * L) // 128
    # Zero-copy, contiguous, lane-dense views.
    p_packed = p2.reshape(MR, 128)
    g_packed = g2.reshape(MR, 128)

    # Constant block-diagonal 0/1 matrix for the segmented (per-group) sums.
    lane = jnp.arange(128)
    seg = (lane[:, None] // L == jnp.arange(G)[None, :]).astype(dtype)

    # Tile rows from the VMEM budget: 2 inputs x 2 buffers + ~4 f32 temps.
    per_row = 2 * 2 * 128 * itemsize + 4 * 128 * 4
    tr = max(8, min(budget // per_row, _MAX_PACKED_ROWS) // 8 * 8)
    tr = min(tr, _round_up(MR, 8))
    if MR > 16:  # keep >= 2 grid steps so v7x can split across its 2 TCs
        tr = min(tr, _round_up(_cdiv(MR, 2), 8))

    precision = None if dtype == jnp.bfloat16 else lax.Precision.HIGHEST
    kernel = functools.partial(_liou_kernel_packed, two_r=two_r, l_size=L,
                               precision=precision)
    out = pl.pallas_call(
        kernel,
        out_shape=jax.ShapeDtypeStruct((MR, G), jnp.float32),
        grid=(_cdiv(MR, tr),),
        in_specs=[
            pl.BlockSpec((tr, 128), lambda i: (i, 0)),
            pl.BlockSpec((tr, 128), lambda i: (i, 0)),
            pl.BlockSpec((128, G), lambda i: (0, 0)),   # resident constant
        ],
        out_specs=pl.BlockSpec((tr, G), lambda i: (i, 0)),
        compiler_params=pltpu.CompilerParams(
            dimension_semantics=("parallel",),
            vmem_limit_bytes=vmem_limit,
        ),
        cost_estimate=cost,
    )(p_packed, g_packed, seg)
    return out.reshape(-1)[:M]


def _liou_small_transpose(p2, g2, two_r, M, L, itemsize, budget, vmem_limit, cost):
    # Fallback for L that does not divide 128: one transposed copy, then
    # lane-dense (L, TM) tiles reduced over sublanes.  No padding over M:
    # the ragged last block's garbage lanes only hit discarded outputs.
    pt = p2.T  # (L, M)
    gt = g2.T
    per_lane = 2 * 2 * L * itemsize + 4 * L * 4
    tm = max(128, min(budget // per_lane, _MAX_LANES) // 128 * 128)
    tm = min(tm, _round_up(M, 128))
    if M > 256:
        tm = min(tm, _round_up(_cdiv(M, 2), 128))

    kernel = functools.partial(_liou_kernel_lanes, two_r=two_r, l_size=L)
    out = pl.pallas_call(
        kernel,
        out_shape=jax.ShapeDtypeStruct((1, M), jnp.float32),
        grid=(_cdiv(M, tm),),
        in_specs=[
            pl.BlockSpec((L, tm), lambda i: (0, i)),
            pl.BlockSpec((L, tm), lambda i: (0, i)),
        ],
        out_specs=pl.BlockSpec((1, tm), lambda i: (0, i)),
        compiler_params=pltpu.CompilerParams(
            dimension_semantics=("parallel",),
            vmem_limit_bytes=vmem_limit,
        ),
        cost_estimate=cost,
    )(pt, gt)
    return out[0]


def _liou_rows(p2, g2, two_r, M, L, itemsize, budget, vmem_limit, cost, l_tile):
    per_elem = 2 * 2 * itemsize + 4 * 4   # dbl-buffered inputs + f32 temporaries
    if l_tile is None:
        tm_single = (budget // (L * per_elem)) // 8 * 8
        if tm_single >= 64:
            tl = L                         # whole reduction axis in one tile
        else:
            tl = max(128, (budget // (256 * per_elem)) // 128 * 128)
            tl = min(tl, _round_up(L, 128))
    else:                                  # test hook / manual override
        tl = min(max(128, _round_up(l_tile, 128)), _round_up(L, 128))
    if tl >= L:
        tl = L
    num_l = _cdiv(L, tl)
    ragged_l = (L % tl) != 0

    tm = max(8, min(budget // (tl * per_elem), _MAX_ROWS) // 8 * 8)
    tm = min(tm, _round_up(M, 8))
    if M > 16:  # keep >= 2 M-tiles so v7x can split the parallel axis
        tm = min(tm, _round_up(_cdiv(M, 2), 8))

    kernel = functools.partial(_liou_kernel_rows, two_r=two_r, l_total=L,
                               l_tile=tl, ragged=ragged_l)
    out = pl.pallas_call(
        kernel,
        out_shape=jax.ShapeDtypeStruct((M, 1), jnp.float32),
        grid=(_cdiv(M, tm), num_l),
        in_specs=[
            pl.BlockSpec((tm, tl), lambda i, l: (i, l)),
            pl.BlockSpec((tm, tl), lambda i, l: (i, l)),
        ],
        out_specs=pl.BlockSpec((tm, 1), lambda i, l: (i, 0)),
        scratch_shapes=[
            pltpu.VMEM((tm, 1), jnp.float32),
            pltpu.VMEM((tm, 1), jnp.float32),
        ],
        compiler_params=pltpu.CompilerParams(
            dimension_semantics=("parallel", "arbitrary"),
            vmem_limit_bytes=vmem_limit,
        ),
        cost_estimate=cost,
    )(p2, g2)
    return out[:, 0]


# ------------------------- public wrapper -------------------------

def liou_loss(predict: jax.Array, ground_truth: jax.Array, radius: float,
              *, l_tile: int | None = None) -> jax.Array:
    """Pallas implementation of LIoU_Loss.forward.

    predict, ground_truth: (B, N, L) float arrays.
    Returns (B, N) float32 = 1 - sum(d_o, dim=2) / sum(d_u, dim=2).
    """
    assert predict.shape == ground_truth.shape
    assert predict.ndim == 3, "expected (B, N, L)"
    B, N, L = predict.shape
    M = B * N
    two_r = 2.0 * float(radius)

    if predict.dtype not in (jnp.float32, jnp.bfloat16):
        predict = predict.astype(jnp.float32)
        ground_truth = ground_truth.astype(jnp.float32)
    itemsize = jnp.dtype(predict.dtype).itemsize

    vmem_limit = _vmem_limit_bytes()
    budget = vmem_limit - 4 * 1024 * 1024

    p2 = predict.reshape(M, L)
    g2 = ground_truth.reshape(M, L)

    cost = pl.CostEstimate(
        flops=6 * M * L,
        transcendentals=0,
        bytes_accessed=2 * M * L * itemsize + M * 4,
    )

    if L < 128 and 128 % L == 0:
        out = _liou_small_packed(p2, g2, two_r, M, L, itemsize, budget, vmem_limit, cost)
    elif L < 128:
        out = _liou_small_transpose(p2, g2, two_r, M, L, itemsize, budget, vmem_limit, cost)
    else:
        out = _liou_rows(p2, g2, two_r, M, L, itemsize, budget, vmem_limit, cost, l_tile)

    return out.reshape(B, N)


# ------------------------- reference & test -------------------------

def _liou_loss_ref(predict, ground_truth, radius):
    p = predict.astype(jnp.float32)
    g = ground_truth.astype(jnp.float32)
    d_o = jnp.abs(jnp.minimum(p + radius, g + radius) - jnp.maximum(p - radius, g - radius))
    d_u = jnp.abs(jnp.maximum(p + radius, g + radius) - jnp.minimum(p - radius, g - radius))
    return 1.0 - jnp.sum(d_o, axis=2) / jnp.sum(d_u, axis=2)


if __name__ == "__main__":
    key = jax.random.PRNGKey(0)
    keys = jax.random.split(key, 10)
    radius = 0.5

    def check(name, shape, dtype, k0, k1, tol, **kw):
        p = jax.random.normal(k0, shape, dtype=jnp.float32).astype(dtype)
        g = jax.random.normal(k1, shape, dtype=jnp.float32).astype(dtype)
        out = jax.block_until_ready(liou_loss(p, g, radius, **kw))
        ref = _liou_loss_ref(p, g, radius)
        assert out.shape == shape[:2], (name, out.shape)
        err = float(jnp.max(jnp.abs(out - ref)))
        assert jnp.allclose(out, ref, atol=tol, rtol=tol), (name, err)

    # Small-L zero-copy packed path (128 % L == 0, M % (128//L) == 0).
    check("packed_f32", (2, 4, 16), jnp.float32, keys[0], keys[1], 1e-5)
    # Small-L packed path with an M tail (pads M up to a multiple of 128//L).
    check("packed_tail", (1, 5, 16), jnp.float32, keys[2], keys[3], 1e-5)
    # Small-L transpose fallback (L does not divide 128).
    check("transpose_f32", (2, 3, 24), jnp.float32, keys[4], keys[5], 1e-5)
    # Large-L rows path, single L tile.
    check("rows_f32", (2, 4, 256), jnp.float32, keys[6], keys[7], 1e-5)
    # Large-L rows path, multiple (ragged) L tiles + ragged M tile.
    check("rows_multi_l", (2, 5, 320), jnp.float32, keys[8], keys[9], 1e-5, l_tile=128)
    # bf16 inputs: elementwise math stays bf16, accumulation in f32.
    check("packed_bf16", (2, 4, 16), jnp.bfloat16, keys[0], keys[1], 2e-2)

    print("KERNEL_OK")
</pallas_src>

<mosaic_0001>
module attributes {stable_mosaic.version = 11 : i64} {
  func.func @_liou_kernel_packed(%arg0: i32, %arg1: memref<8x128xf32, #tpu.memory_space<vmem>>, %arg2: memref<8x128xf32, #tpu.memory_space<vmem>>, %arg3: memref<128x8xf32, #tpu.memory_space<vmem>>, %arg4: memref<8x8xf32, #tpu.memory_space<vmem>>) attributes {dimension_semantics = [#tpu.dimension_semantics<parallel>], iteration_bounds = array<i64: 1>, scalar_prefetch = 0 : i64, scratch_operands = 0 : i64, tpu.core_type = #tpu.core_type<tc>, window_params = [{transform_indices = @transform_0, window_bounds = array<i64: 8, 128>}, {transform_indices = @transform_1, window_bounds = array<i64: 8, 128>}, {pipeline_mode = #tpu.pipeline_mode<synchronous>, transform_indices = @transform_2, window_bounds = array<i64: 128, 8>}, {transform_indices = @transform_3, window_bounds = array<i64: 8, 8>}]} {
    %c0 = arith.constant 0 : index
    %c0_0 = arith.constant 0 : index
    %0 = vector.load %arg1[%c0, %c0_0] : memref<8x128xf32, #tpu.memory_space<vmem>>, vector<8x128xf32>
    %c0_1 = arith.constant 0 : index
    %c0_2 = arith.constant 0 : index
    %1 = vector.load %arg2[%c0_1, %c0_2] : memref<8x128xf32, #tpu.memory_space<vmem>>, vector<8x128xf32>
    %2 = arith.subf %0, %1 : vector<8x128xf32>
    %3 = math.absf %2 : vector<8x128xf32>
    %cst = arith.constant 1.000000e+00 : f32
    %4 = vector.broadcast %cst : f32 to vector<8x128xf32>
    %5 = arith.subf %4, %3 : vector<8x128xf32>
    %6 = math.absf %5 : vector<8x128xf32>
    %c0_3 = arith.constant 0 : index
    %c0_4 = arith.constant 0 : index
    %7 = vector.load %arg3[%c0_3, %c0_4] : memref<128x8xf32, #tpu.memory_space<vmem>>, vector<128x8xf32>
    %cst_5 = arith.constant dense<0.000000e+00> : vector<8x8xf32>
    %8 = tpu.matmul %6, %7, %cst_5 {dimension_numbers = #tpu.dot_dimension_numbers<[1], [0], [0], [1], [0, 0, 1, 1], [], []>, precision = #tpu.contract_precision<fp32>} : vector<8x128xf32>, vector<128x8xf32>, vector<8x8xf32> -> vector<8x8xf32>
    %cst_6 = arith.constant dense<0.000000e+00> : vector<8x8xf32>
    %9 = tpu.matmul %3, %7, %cst_6 {dimension_numbers = #tpu.dot_dimension_numbers<[1], [0], [0], [1], [0, 0, 1, 1], [], []>, precision = #tpu.contract_precision<fp32>} : vector<8x128xf32>, vector<128x8xf32>, vector<8x8xf32> -> vector<8x8xf32>
    %cst_7 = arith.constant 1.600000e+01 : f32
    %10 = vector.broadcast %cst_7 : f32 to vector<8x8xf32>
    %11 = arith.addf %9, %10 : vector<8x8xf32>
    %12 = arith.divf %8, %11 : vector<8x8xf32>
    %cst_8 = arith.constant 1.000000e+00 : f32
    %13 = vector.broadcast %cst_8 : f32 to vector<8x8xf32>
    %14 = arith.subf %13, %12 : vector<8x8xf32>
    %c0_9 = arith.constant 0 : index
    %c0_10 = arith.constant 0 : index
    %15 = vector.load %arg4[%c0_9, %c0_10] : memref<8x8xf32, #tpu.memory_space<vmem>>, vector<8x8xf32>
    tpu.vector_store %arg4[%c0_9, %c0_10], %14 {strides = array<i32>} : memref<8x8xf32, #tpu.memory_space<vmem>>, vector<8x8xf32>,
    return
  }
  func.func @transform_0(%arg0: i32) -> (i32, i32) {
    %c0_i32 = arith.constant 0 : i32
    %c0_i32_0 = arith.constant 0 : i32
    return %arg0, %c0_i32 : i32, i32
  }
  func.func @transform_1(%arg0: i32) -> (i32, i32) {
    %c0_i32 = arith.constant 0 : i32
    %c0_i32_0 = arith.constant 0 : i32
    return %arg0, %c0_i32 : i32, i32
  }
  func.func @transform_2(%arg0: i32) -> (i32, i32) {
    %c0_i32 = arith.constant 0 : i32
    %c0_i32_0 = arith.constant 0 : i32
    %c0_i32_1 = arith.constant 0 : i32
    return %c0_i32, %c0_i32_0 : i32, i32
  }
  func.func @transform_3(%arg0: i32) -> (i32, i32) {
    %c0_i32 = arith.constant 0 : i32
    %c0_i32_0 = arith.constant 0 : i32
    return %arg0, %c0_i32 : i32, i32
  }
}

</mosaic_0001>

<llo_original>
// kernel: tpu_custom_call.1
$region0: #{tpu_custom_call.1}
  #allocation0 [shape = 'u32[]', space=smem, size = 0x4, offset = 0x4, fixed_abs, tag = 'smem constant byte address 0x4 - core index']
  #allocation1 [shape = 'u32[144,128]{1,0:T(1,128)}', space=vmem, size = 0x12000, scoped, tag = 'internal scratch']
  %s0 = inlined_call_operand.vmem [shape: f32[1,128], index: 0, kind: input, shape index: {}]
  %s1 = inlined_call_operand.vmem [shape: f32[1,128], index: 1, kind: input, shape index: {}]
  %s2 = inlined_call_operand.vmem [shape: f32[128,8], index: 2, kind: input, shape index: {}]
  %s3 = inlined_call_operand.hbm [shape: f32[1,8], index: 3, kind: output, shape index: {}]
  %s4 = sld [smem:[#allocation0]]
  $region22: #{tpu_custom_call.1} parent=0
    _
  %s6 = ssub.s32 1, %s4
  %s7 = scalar_select 0, %s6, %s4
  $region1: #{tpu_custom_call.1} parent=0
    #allocation2 [shape = 'u8[4096]{0}', space=vmem, size = 0x1000, scoped, tag = 'output window, operand 0, single buffered']
    #allocation3 [shape = 's32[1]{0}', space=sflag, size = 0x4, scoped, tag = 'scoped memory for tpu_custom_call.1']
    %8 = vsyncpa [#allocation3], 0
    // Predicated region
    $region2: #{tpu_custom_call.1} parent=1 // pred_check
      _
    $region3: #{tpu_custom_call.1} parent=1 // pred_check_branch
      %10 = sbr.rel (0) target = $region5
    $region4: #{tpu_custom_call.1} parent=1 // pred_region
      _
    $region5: #{tpu_custom_call.1} parent=1 // pred_fallthru
      _
    // Predicated region
    $region6: #{tpu_custom_call.1} parent=1 // pred_check
      _
    $region7: #{tpu_custom_call.1} parent=1 // pred_check_branch
      %12 = sbr.rel (0) target = $region9
    $region8: #{tpu_custom_call.1} parent=1 // pred_region
      _
    $region9: #{tpu_custom_call.1} parent=1 // pred_fallthru
      _
    // Predicated region
    $region10: #{tpu_custom_call.1} parent=1 // pred_check
      _
    $region11: #{tpu_custom_call.1} parent=1 // pred_check_branch
      %14 = sbr.rel (0) target = $region13
    $region12: #{tpu_custom_call.1} parent=1 // pred_region
      _
    $region13: #{tpu_custom_call.1} parent=1 // pred_fallthru
      _
    %v15 = vld [vmem:[%s0] sm:$0xff]
    %v16 = vld [vmem:[%s1] sm:$0xff]
    %v17 = vsub.f32 %v15, %v16
    %v18 = vand.u32 2147483647, %v17
    %v19 = vsub.f32 1.0, %v18
    %v20 = vand.u32 2147483647, %v19
    %v21 = vld [vmem:[%s2] sm:$0xff]
    %v22 = vld [vmem:[%s2 + $0x8] sm:$0xff]
    %v23 = vld [vmem:[%s2 + $0x10] sm:$0xff]
    %v24 = vld [vmem:[%s2 + $0x18] sm:$0xff]
    %v25 = vld [vmem:[%s2 + $0x20] sm:$0xff]
    %v26 = vld [vmem:[%s2 + $0x28] sm:$0xff]
    %v27 = vld [vmem:[%s2 + $0x30] sm:$0xff]
    %v28 = vld [vmem:[%s2 + $0x38] sm:$0xff]
    %v29 = vld [vmem:[%s2 + $0x40] sm:$0xff]
    %v30 = vld [vmem:[%s2 + $0x48] sm:$0xff]
    %v31 = vld [vmem:[%s2 + $0x50] sm:$0xff]
    %v32 = vld [vmem:[%s2 + $0x58] sm:$0xff]
    %v33 = vld [vmem:[%s2 + $0x60] sm:$0xff]
    %v34 = vld [vmem:[%s2 + $0x68] sm:$0xff]
    %v35 = vld [vmem:[%s2 + $0x70] sm:$0xff]
    %v36 = vld [vmem:[%s2 + $0x78] sm:$0xff]
    %37 = vmatprep.subr.mxu0 0.0
    %v38 = vand.u32 %v36, 4294901760
    %39 = vmatpush1.msra.mxu0 %v38
    %40 = vmatprep.subr.mxu0 0.0
    %v41 = vand.u32 %v35, 4294901760
    %42 = vmatpush1.msra.mxu0 %v41
    %43 = vmatprep.subr.mxu0 0.0
    %v44 = vand.u32 %v34, 4294901760
    %45 = vmatpush1.msra.mxu0 %v44
    %46 = vmatprep.subr.mxu0 0.0
    %v47 = vand.u32 %v33, 4294901760
    %48 = vmatpush1.msra.mxu0 %v47
    %49 = vmatprep.subr.mxu0 0.0
    %v50 = vand.u32 %v32, 4294901760
    %51 = vmatpush1.msra.mxu0 %v50
    %52 = vmatprep.subr.mxu0 0.0
    %v53 = vand.u32 %v31, 4294901760
    %54 = vmatpush1.msra.mxu0 %v53
    %55 = vmatprep.subr.mxu0 0.0
    %v56 = vand.u32 %v30, 4294901760
    %57 = vmatpush1.msra.mxu0 %v56
    %58 = vmatprep.subr.mxu0 0.0
    %v59 = vand.u32 %v29, 4294901760
    %60 = vmatpush1.msra.mxu0 %v59
    %61 = vmatprep.subr.mxu0 0.0
    %v62 = vand.u32 %v28, 4294901760
    %63 = vmatpush1.msra.mxu0 %v62
    %64 = vmatprep.subr.mxu0 0.0
    %v65 = vand.u32 %v27, 4294901760
    %66 = vmatpush1.msra.mxu0 %v65
    %67 = vmatprep.subr.mxu0 0.0
    %v68 = vand.u32 %v26, 4294901760
    %69 = vmatpush1.msra.mxu0 %v68
    %70 = vmatprep.subr.mxu0 0.0
    %v71 = vand.u32 %v25, 4294901760
    %72 = vmatpush1.msra.mxu0 %v71
    %73 = vmatprep.subr.mxu0 0.0
    %v74 = vand.u32 %v24, 4294901760
    %75 = vmatpush1.msra.mxu0 %v74
    %76 = vmatprep.subr.mxu0 0.0
    %v77 = vand.u32 %v23, 4294901760
    %78 = vmatpush1.msra.mxu0 %v77
    %79 = vmatprep.subr.mxu0 0.0
    %v80 = vand.u32 %v22, 4294901760
    %81 = vmatpush1.msra.mxu0 %v80
    %82 = vmatprep.subr.mxu0 0.0
    %v83 = vand.u32 %v21, 4294901760
    %84 = vmatpush1.msra.mxu0 %v83
    %85 = vmatprep.subr.mxu0 0.0
    %86 = vmatpush2.msra.mxu0 0.0
    %87 = vmatprep.subr.mxu0 0.0
    %88 = vmatpush2.msra.mxu0 0.0
    %89 = vmatprep.subr.mxu0 0.0
    %90 = vmatpush2.msra.mxu0 0.0
    %91 = vmatprep.subr.mxu0 0.0
    %92 = vmatpush2.msra.mxu0 0.0
    %93 = vmatprep.subr.mxu0 0.0
    %94 = vmatpush2.msra.mxu0 0.0
    %95 = vmatprep.subr.mxu0 0.0
    %96 = vmatpush2.msra.mxu0 0.0
    %97 = vmatprep.subr.mxu0 0.0
    %98 = vmatpush2.msra.mxu0 0.0
    %99 = vmatprep.subr.mxu0 0.0
    %100 = vmatpush2.msra.mxu0 0.0
    %101 = vmatprep.subr.mxu0 0.0
    %102 = vmatpush2.msra.mxu0 0.0
    %103 = vmatprep.subr.mxu0 0.0
    %104 = vmatpush2.msra.mxu0 0.0
    %105 = vmatprep.subr.mxu0 0.0
    %106 = vmatpush2.msra.mxu0 0.0
    %107 = vmatprep.subr.mxu0 0.0
    %108 = vmatpush2.msra.mxu0 0.0
    %109 = vmatprep.subr.mxu0 0.0
    %110 = vmatpush2.msra.mxu0 0.0
    %111 = vmatprep.subr.mxu0 0.0
    %112 = vmatpush2.msra.mxu0 0.0
    %113 = vmatprep.subr.mxu0 0.0
    %114 = vmatpush2.msra.mxu0 0.0
    %115 = vmatprep.subr.mxu0 0.0
    %116 = vmatpush2.msra.mxu0 0.0
    %117 = vmatprep.mubr.f32.mxu0 0.0
    %v118 = vand.u32 %v20, 4294901760
    %v119 = vsub.f32 %v20, %v118
    %v120 = vand.u32 %v119, 4294901760
    %v121 = vsub.f32 %v119, %v120
    %v122 = vand.u32 %v121, 4294901760
    %123 = vmatmul.mubr.f32.gmra.mxu0 %v122
    %v124 = vpop.f32.mrf.mxu0
    %v125 = vadd.f32 0.0, %v124
    %v126 = vpop.f32.mrf.mxu0
    %127 = vdwg.mxu0
    %128 = vmatprep.subr.mxu0 0.0
    %v129 = vand.u32 %v36, 4294901760
    %v130 = vsub.f32 %v36, %v129
    %v131 = vand.u32 %v130, 4294901760
    %v132 = vsub.f32 %v130, %v131
    %v133 = vand.u32 %v132, 4294901760
    %134 = vmatpush1.msra.mxu0 %v133
    %135 = vmatprep.subr.mxu0 0.0
    %v136 = vand.u32 %v35, 4294901760
    %v137 = vsub.f32 %v35, %v136
    %v138 = vand.u32 %v137, 4294901760
    %v139 = vsub.f32 %v137, %v138
    %v140 = vand.u32 %v139, 4294901760
    %141 = vmatpush1.msra.mxu0 %v140
    %142 = vmatprep.subr.mxu0 0.0
    %v143 = vand.u32 %v34, 4294901760
    %v144 = vsub.f32 %v34, %v143
    %v145 = vand.u32 %v144, 4294901760
    %v146 = vsub.f32 %v144, %v145
    %v147 = vand.u32 %v146, 4294901760
    %148 = vmatpush1.msra.mxu0 %v147
    %149 = vmatprep.subr.mxu0 0.0
    %v150 = vand.u32 %v33, 4294901760
    %v151 = vsub.f32 %v33, %v150
    %v152 = vand.u32 %v151, 4294901760
    %v153 = vsub.f32 %v151, %v152
    %v154 = vand.u32 %v153, 4294901760
    %155 = vmatpush1.msra.mxu0 %v154
    %156 = vmatprep.subr.mxu0 0.0
    %v157 = vand.u32 %v32, 4294901760
    %v158 = vsub.f32 %v32, %v157
    %v159 = vand.u32 %v158, 4294901760
    %v160 = vsub.f32 %v158, %v159
    %v161 = vand.u32 %v160, 4294901760
    %162 = vmatpush1.msra.mxu0 %v161
    %163 = vmatprep.subr.mxu0 0.0
    %v164 = vand.u32 %v31, 4294901760
    %v165 = vsub.f32 %v31, %v164
    %v166 = vand.u32 %v165, 4294901760
    %v167 = vsub.f32 %v165, %v166
    %v168 = vand.u32 %v167, 4294901760
    %169 = vmatpush1.msra.mxu0 %v168
    %170 = vmatprep.subr.mxu0 0.0
    %v171 = vand.u32 %v30, 4294901760
    %v172 = vsub.f32 %v30, %v171
    %v173 = vand.u32 %v172, 4294901760
    %v174 = vsub.f32 %v172, %v173
    %v175 = vand.u32 %v174, 4294901760
    %176 = vmatpush1.msra.mxu0 %v175
    %177 = vmatprep.subr.mxu0 0.0
    %v178 = vand.u32 %v29, 4294901760
    %v179 = vsub.f32 %v29, %v178
    %v180 = vand.u32 %v179, 4294901760
    %v181 = vsub.f32 %v179, %v180
    %v182 = vand.u32 %v181, 4294901760
    %183 = vmatpush1.msra.mxu0 %v182
    %184 = vmatprep.subr.mxu0 0.0
    %v185 = vand.u32 %v28, 4294901760
    %v186 = vsub.f32 %v28, %v185
    %v187 = vand.u32 %v186, 4294901760
    %v188 = vsub.f32 %v186, %v187
    %v189 = vand.u32 %v188, 4294901760
    %190 = vmatpush1.msra.mxu0 %v189
    %191 = vmatprep.subr.mxu0 0.0
    %v192 = vand.u32 %v27, 4294901760
    %v193 = vsub.f32 %v27, %v192
    %v194 = vand.u32 %v193, 4294901760
    %v195 = vsub.f32 %v193, %v194
    %v196 = vand.u32 %v195, 4294901760
    %197 = vmatpush1.msra.mxu0 %v196
    %198 = vmatprep.subr.mxu0 0.0
    %v199 = vand.u32 %v26, 4294901760
    %v200 = vsub.f32 %v26, %v199
    %v201 = vand.u32 %v200, 4294901760
    %v202 = vsub.f32 %v200, %v201
    %v203 = vand.u32 %v202, 4294901760
    %204 = vmatpush1.msra.mxu0 %v203
    %205 = vmatprep.subr.mxu0 0.0
    %v206 = vand.u32 %v25, 4294901760
    %v207 = vsub.f32 %v25, %v206
    %v208 = vand.u32 %v207, 4294901760
    %v209 = vsub.f32 %v207, %v208
    %v210 = vand.u32 %v209, 4294901760
    %211 = vmatpush1.msra.mxu0 %v210
    %212 = vmatprep.subr.mxu0 0.0
    %v213 = vand.u32 %v24, 4294901760
    %v214 = vsub.f32 %v24, %v213
    %v215 = vand.u32 %v214, 4294901760
    %v216 = vsub.f32 %v214, %v215
    %v217 = vand.u32 %v216, 4294901760
    %218 = vmatpush1.msra.mxu0 %v217
    %219 = vmatprep.subr.mxu0 0.0
    %v220 = vand.u32 %v23, 4294901760
    %v221 = vsub.f32 %v23, %v220
    %v222 = vand.u32 %v221, 4294901760
    %v223 = vsub.f32 %v221, %v222
    %v224 = vand.u32 %v223, 4294901760
    %225 = vmatpush1.msra.mxu0 %v224
    %226 = vmatprep.subr.mxu0 0.0
    %v227 = vand.u32 %v22, 4294901760
    %v228 = vsub.f32 %v22, %v227
    %v229 = vand.u32 %v228, 4294901760
    %v230 = vsub.f32 %v228, %v229
    %v231 = vand.u32 %v230, 4294901760
    %232 = vmatpush1.msra.mxu0 %v231
    %233 = vmatprep.subr.mxu0 0.0
    %v234 = vand.u32 %v21, 4294901760
    %v235 = vsub.f32 %v21, %v234
    %v236 = vand.u32 %v235, 4294901760
    %v237 = vsub.f32 %v235, %v236
    %v238 = vand.u32 %v237, 4294901760
    %239 = vmatpush1.msra.mxu0 %v238
    %240 = vmatprep.subr.mxu0 0.0
    %241 = vmatpush2.msra.mxu0 0.0
    %242 = vmatprep.subr.mxu0 0.0
    %243 = vmatpush2.msra.mxu0 0.0
    %244 = vmatprep.subr.mxu0 0.0
    %245 = vmatpush2.msra.mxu0 0.0
    %246 = vmatprep.subr.mxu0 0.0
    %247 = vmatpush2.msra.mxu0 0.0
    %248 = vmatprep.subr.mxu0 0.0
    %249 = vmatpush2.msra.mxu0 0.0
    %250 = vmatprep.subr.mxu0 0.0
    %251 = vmatpush2.msra.mxu0 0.0
    %252 = vmatprep.subr.mxu0 0.0
    %253 = vmatpush2.msra.mxu0 0.0
    %254 = vmatprep.subr.mxu0 0.0
    %255 = vmatpush2.msra.mxu0 0.0
    %256 = vmatprep.subr.mxu0 0.0
    %257 = vmatpush2.msra.mxu0 0.0
    %258 = vmatprep.subr.mxu0 0.0
    %259 = vmatpush2.msra.mxu0 0.0
    %260 = vmatprep.subr.mxu0 0.0
    %261 = vmatpush2.msra.mxu0 0.0
    %262 = vmatprep.subr.mxu0 0.0
    %263 = vmatpush2.msra.mxu0 0.0
    %264 = vmatprep.subr.mxu0 0.0
    %265 = vmatpush2.msra.mxu0 0.0
    %266 = vmatprep.subr.mxu0 0.0
    %267 = vmatpush2.msra.mxu0 0.0
    %268 = vmatprep.subr.mxu0 0.0
    %269 = vmatpush2.msra.mxu0 0.0
    %270 = vmatprep.subr.mxu0 0.0
    %271 = vmatpush2.msra.mxu0 0.0
    %272 = vmatprep.mubr.f32.mxu0 0.0
    %v273 = vand.u32 %v20, 4294901760
    %274 = vmatmul.mubr.f32.gmra.mxu0 %v273
    %v275 = vpop.f32.mrf.mxu0
    %v276 = vadd.f32 %v125, %v275
    %v277 = vpop.f32.mrf.mxu0
    %278 = vdwg.mxu0
    %279 = vmatprep.subr.mxu0 0.0
    %v280 = vand.u32 %v36, 4294901760
    %v281 = vsub.f32 %v36, %v280
    %282 = vmatpush1.msra.mxu0 %v281
    %283 = vmatprep.subr.mxu0 0.0
    %v284 = vand.u32 %v35, 4294901760
    %v285 = vsub.f32 %v35, %v284
    %286 = vmatpush1.msra.mxu0 %v285
    %287 = vmatprep.subr.mxu0 0.0
    %v288 = vand.u32 %v34, 4294901760
    %v289 = vsub.f32 %v34, %v288
    %290 = vmatpush1.msra.mxu0 %v289
    %291 = vmatprep.subr.mxu0 0.0
    %v292 = vand.u32 %v33, 4294901760
    %v293 = vsub.f32 %v33, %v292
    %294 = vmatpush1.msra.mxu0 %v293
    %295 = vmatprep.subr.mxu0 0.0
    %v296 = vand.u32 %v32, 4294901760
    %v297 = vsub.f32 %v32, %v296
    %298 = vmatpush1.msra.mxu0 %v297
    %299 = vmatprep.subr.mxu0 0.0
    %v300 = vand.u32 %v31, 4294901760
    %v301 = vsub.f32 %v31, %v300
    %302 = vmatpush1.msra.mxu0 %v301
    %303 = vmatprep.subr.mxu0 0.0
    %v304 = vand.u32 %v30, 4294901760
    %v305 = vsub.f32 %v30, %v304
    %306 = vmatpush1.msra.mxu0 %v305
    %307 = vmatprep.subr.mxu0 0.0
    %v308 = vand.u32 %v29, 4294901760
    %v309 = vsub.f32 %v29, %v308
    %310 = vmatpush1.msra.mxu0 %v309
    %311 = vmatprep.subr.mxu0 0.0
    %v312 = vand.u32 %v28, 4294901760
    %v313 = vsub.f32 %v28, %v312
    %314 = vmatpush1.msra.mxu0 %v313
    %315 = vmatprep.subr.mxu0 0.0
    %v316 = vand.u32 %v27, 4294901760
    %v317 = vsub.f32 %v27, %v316
    %318 = vmatpush1.msra.mxu0 %v317
    %319 = vmatprep.subr.mxu0 0.0
    %v320 = vand.u32 %v26, 4294901760
    %v321 = vsub.f32 %v26, %v320
    %322 = vmatpush1.msra.mxu0 %v321
    %323 = vmatprep.subr.mxu0 0.0
    %v324 = vand.u32 %v25, 4294901760
    %v325 = vsub.f32 %v25, %v324
    %326 = vmatpush1.msra.mxu0 %v325
    %327 = vmatprep.subr.mxu0 0.0
    %v328 = vand.u32 %v24, 4294901760
    %v329 = vsub.f32 %v24, %v328
    %330 = vmatpush1.msra.mxu0 %v329
    %331 = vmatprep.subr.mxu0 0.0
    %v332 = vand.u32 %v23, 4294901760
    %v333 = vsub.f32 %v23, %v332
    %334 = vmatpush1.msra.mxu0 %v333
    %335 = vmatprep.subr.mxu0 0.0
    %v336 = vand.u32 %v22, 4294901760
    %v337 = vsub.f32 %v22, %v336
    %338 = vmatpush1.msra.mxu0 %v337
    %339 = vmatprep.subr.mxu0 0.0
    %v340 = vand.u32 %v21, 4294901760
    %v341 = vsub.f32 %v21, %v340
    %342 = vmatpush1.msra.mxu0 %v341
    %343 = vmatprep.subr.mxu0 0.0
    %344 = vmatpush2.msra.mxu0 0.0
    %345 = vmatprep.subr.mxu0 0.0
    %346 = vmatpush2.msra.mxu0 0.0
    %347 = vmatprep.subr.mxu0 0.0
    %348 = vmatpush2.msra.mxu0 0.0
    %349 = vmatprep.subr.mxu0 0.0
    %350 = vmatpush2.msra.mxu0 0.0
    %351 = vmatprep.subr.mxu0 0.0
    %352 = vmatpush2.msra.mxu0 0.0
    %353 = vmatprep.subr.mxu0 0.0
    %354 = vmatpush2.msra.mxu0 0.0
    %355 = vmatprep.subr.mxu0 0.0
    %356 = vmatpush2.msra.mxu0 0.0
    %357 = vmatprep.subr.mxu0 0.0
    %358 = vmatpush2.msra.mxu0 0.0
    %359 = vmatprep.subr.mxu0 0.0
    %360 = vmatpush2.msra.mxu0 0.0
    %361 = vmatprep.subr.mxu0 0.0
    %362 = vmatpush2.msra.mxu0 0.0
    %363 = vmatprep.subr.mxu0 0.0
    %364 = vmatpush2.msra.mxu0 0.0
    %365 = vmatprep.subr.mxu0 0.0
    %366 = vmatpush2.msra.mxu0 0.0
    %367 = vmatprep.subr.mxu0 0.0
    %368 = vmatpush2.msra.mxu0 0.0
    %369 = vmatprep.subr.mxu0 0.0
    %370 = vmatpush2.msra.mxu0 0.0
    %371 = vmatprep.subr.mxu0 0.0
    %372 = vmatpush2.msra.mxu0 0.0
    %373 = vmatprep.subr.mxu0 0.0
    %374 = vmatpush2.msra.mxu0 0.0
    %375 = vmatprep.mubr.f32.mxu0 0.0
    %v376 = vand.u32 %v20, 4294901760
    %v377 = vsub.f32 %v20, %v376
    %378 = vmatmul.mubr.f32.gmra.mxu0 %v377
    %v379 = vpop.f32.mrf.mxu0
    %v380 = vadd.f32 %v276, %v379
    %v381 = vpop.f32.mrf.mxu0
    %382 = vdwg.mxu0
    %383 = vmatprep.subr.mxu0 0.0
    %v384 = vand.u32 %v36, 4294901760
    %385 = vmatpush1.msra.mxu0 %v384
    %386 = vmatprep.subr.mxu0 0.0
    %v387 = vand.u32 %v35, 4294901760
    %388 = vmatpush1.msra.mxu0 %v387
    %389 = vmatprep.subr.mxu0 0.0
    %v390 = vand.u32 %v34, 4294901760
    %391 = vmatpush1.msra.mxu0 %v390
    %392 = vmatprep.subr.mxu0 0.0
    %v393 = vand.u32 %v33, 4294901760
    %394 = vmatpush1.msra.mxu0 %v393
    %395 = vmatprep.subr.mxu0 0.0
    %v396 = vand.u32 %v32, 4294901760
    %397 = vmatpush1.msra.mxu0 %v396
    %398 = vmatprep.subr.mxu0 0.0
    %v399 = vand.u32 %v31, 4294901760
    %400 = vmatpush1.msra.mxu0 %v399
    %401 = vmatprep.subr.mxu0 0.0
    %v402 = vand.u32 %v30, 4294901760
    %403 = vmatpush1.msra.mxu0 %v402
    %404 = vmatprep.subr.mxu0 0.0
    %v405 = vand.u32 %v29, 4294901760
    %406 = vmatpush1.msra.mxu0 %v405
    %407 = vmatprep.subr.mxu0 0.0
    %v408 = vand.u32 %v28, 4294901760
    %409 = vmatpush1.msra.mxu0 %v408
    %410 = vmatprep.subr.mxu0 0.0
    %v411 = vand.u32 %v27, 4294901760
    %412 = vmatpush1.msra.mxu0 %v411
    %413 = vmatprep.subr.mxu0 0.0
    %v414 = vand.u32 %v26, 4294901760
    %415 = vmatpush1.msra.mxu0 %v414
    %416 = vmatprep.subr.mxu0 0.0
    %v417 = vand.u32 %v25, 4294901760
    %418 = vmatpush1.msra.mxu0 %v417
    %419 = vmatprep.subr.mxu0 0.0
    %v420 = vand.u32 %v24, 4294901760
    %421 = vmatpush1.msra.mxu0 %v420
    %422 = vmatprep.subr.mxu0 0.0
    %v423 = vand.u32 %v23, 4294901760
    %424 = vmatpush1.msra.mxu0 %v423
    %425 = vmatprep.subr.mxu0 0.0
    %v426 = vand.u32 %v22, 4294901760
    %427 = vmatpush1.msra.mxu0 %v426
    %428 = vmatprep.subr.mxu0 0.0
    %v429 = vand.u32 %v21, 4294901760
    %430 = vmatpush1.msra.mxu0 %v429
    %431 = vmatprep.subr.mxu0 0.0
    %432 = vmatpush2.msra.mxu0 0.0
    %433 = vmatprep.subr.mxu0 0.0
    %434 = vmatpush2.msra.mxu0 0.0
    %435 = vmatprep.subr.mxu0 0.0
    %436 = vmatpush2.msra.mxu0 0.0
    %437 = vmatprep.subr.mxu0 0.0
    %438 = vmatpush2.msra.mxu0 0.0
    %439 = vmatprep.subr.mxu0 0.0
    %440 = vmatpush2.msra.mxu0 0.0
    %441 = vmatprep.subr.mxu0 0.0
    %442 = vmatpush2.msra.mxu0 0.0
    %443 = vmatprep.subr.mxu0 0.0
    %444 = vmatpush2.msra.mxu0 0.0
    %445 = vmatprep.subr.mxu0 0.0
    %446 = vmatpush2.msra.mxu0 0.0
    %447 = vmatprep.subr.mxu0 0.0
    %448 = vmatpush2.msra.mxu0 0.0
    %449 = vmatprep.subr.mxu0 0.0
    %450 = vmatpush2.msra.mxu0 0.0
    %451 = vmatprep.subr.mxu0 0.0
    %452 = vmatpush2.msra.mxu0 0.0
    %453 = vmatprep.subr.mxu0 0.0
    %454 = vmatpush2.msra.mxu0 0.0
    %455 = vmatprep.subr.mxu0 0.0
    %456 = vmatpush2.msra.mxu0 0.0
    %457 = vmatprep.subr.mxu0 0.0
    %458 = vmatpush2.msra.mxu0 0.0
    %459 = vmatprep.subr.mxu0 0.0
    %460 = vmatpush2.msra.mxu0 0.0
    %461 = vmatprep.subr.mxu0 0.0
    %462 = vmatpush2.msra.mxu0 0.0
    %463 = vmatprep.mubr.f32.mxu0 0.0
    %v464 = vand.u32 %v20, 4294901760
    %v465 = vsub.f32 %v20, %v464
    %v466 = vand.u32 %v465, 4294901760
    %467 = vmatmul.mubr.f32.gmra.mxu0 %v466
    %v468 = vpop.f32.mrf.mxu0
    %v469 = vadd.f32 %v380, %v468
    %v470 = vpop.f32.mrf.mxu0
    %471 = vdwg.mxu0
    %472 = vmatprep.subr.mxu0 0.0
    %v473 = vand.u32 %v36, 4294901760
    %v474 = vsub.f32 %v36, %v473
    %v475 = vand.u32 %v474, 4294901760
    %476 = vmatpush1.msra.mxu0 %v475
    %477 = vmatprep.subr.mxu0 0.0
    %v478 = vand.u32 %v35, 4294901760
    %v479 = vsub.f32 %v35, %v478
    %v480 = vand.u32 %v479, 4294901760
    %481 = vmatpush1.msra.mxu0 %v480
    %482 = vmatprep.subr.mxu0 0.0
    %v483 = vand.u32 %v34, 4294901760
    %v484 = vsub.f32 %v34, %v483
    %v485 = vand.u32 %v484, 4294901760
    %486 = vmatpush1.msra.mxu0 %v485
    %487 = vmatprep.subr.mxu0 0.0
    %v488 = vand.u32 %v33, 4294901760
    %v489 = vsub.f32 %v33, %v488
    %v490 = vand.u32 %v489, 4294901760
    %491 = vmatpush1.msra.mxu0 %v490
    %492 = vmatprep.subr.mxu0 0.0
    %v493 = vand.u32 %v32, 4294901760
    %v494 = vsub.f32 %v32, %v493
    %v495 = vand.u32 %v494, 4294901760
    %496 = vmatpush1.msra.mxu0 %v495
    %497 = vmatprep.subr.mxu0 0.0
    %v498 = vand.u32 %v31, 4294901760
    %v499 = vsub.f32 %v31, %v498
    %v500 = vand.u32 %v499, 4294901760
    %501 = vmatpush1.msra.mxu0 %v500
    %502 = vmatprep.subr.mxu0 0.0
    %v503 = vand.u32 %v30, 4294901760
    %v504 = vsub.f32 %v30, %v503
    %v505 = vand.u32 %v504, 4294901760
    %506 = vmatpush1.msra.mxu0 %v505
    %507 = vmatprep.subr.mxu0 0.0
    %v508 = vand.u32 %v29, 4294901760
    %v509 = vsub.f32 %v29, %v508
    %v510 = vand.u32 %v509, 4294901760
    %511 = vmatpush1.msra.mxu0 %v510
    %512 = vmatprep.subr.mxu0 0.0
    %v513 = vand.u32 %v28, 4294901760
    %v514 = vsub.f32 %v28, %v513
    %v515 = vand.u32 %v514, 4294901760
    %516 = vmatpush1.msra.mxu0 %v515
    %517 = vmatprep.subr.mxu0 0.0
    %v518 = vand.u32 %v27, 4294901760
    %v519 = vsub.f32 %v27, %v518
    %v520 = vand.u32 %v519, 4294901760
    %521 = vmatpush1.msra.mxu0 %v520
    %522 = vmatprep.subr.mxu0 0.0
    %v523 = vand.u32 %v26, 4294901760
    %v524 = vsub.f32 %v26, %v523
    %v525 = vand.u32 %v524, 4294901760
    %526 = vmatpush1.msra.mxu0 %v525
    %527 = vmatprep.subr.mxu0 0.0
    %v528 = vand.u32 %v25, 4294901760
    %v529 = vsub.f32 %v25, %v528
    %v530 = vand.u32 %v529, 4294901760
    %531 = vmatpush1.msra.mxu0 %v530
    %532 = vmatprep.subr.mxu0 0.0
    %v533 = vand.u32 %v24, 4294901760
    %v534 = vsub.f32 %v24, %v533
    %v535 = vand.u32 %v534, 4294901760
    %536 = vmatpush1.msra.mxu0 %v535
    %537 = vmatprep.subr.mxu0 0.0
    %v538 = vand.u32 %v23, 4294901760
    %v539 = vsub.f32 %v23, %v538
    %v540 = vand.u32 %v539, 4294901760
    %541 = vmatpush1.msra.mxu0 %v540
    %542 = vmatprep.subr.mxu0 0.0
    %v543 = vand.u32 %v22, 4294901760
    %v544 = vsub.f32 %v22, %v543
    %v545 = vand.u32 %v544, 4294901760
    %546 = vmatpush1.msra.mxu0 %v545
    %547 = vmatprep.subr.mxu0 0.0
    %v548 = vand.u32 %v21, 4294901760
    %v549 = vsub.f32 %v21, %v548
    %v550 = vand.u32 %v549, 4294901760
    %551 = vmatpush1.msra.mxu0 %v550
    %552 = vmatprep.subr.mxu0 0.0
    %553 = vmatpush2.msra.mxu0 0.0
    %554 = vmatprep.subr.mxu0 0.0
    %555 = vmatpush2.msra.mxu0 0.0
    %556 = vmatprep.subr.mxu0 0.0
    %557 = vmatpush2.msra.mxu0 0.0
    %558 = vmatprep.subr.mxu0 0.0
    %559 = vmatpush2.msra.mxu0 0.0
    %560 = vmatprep.subr.mxu0 0.0
    %561 = vmatpush2.msra.mxu0 0.0
    %562 = vmatprep.subr.mxu0 0.0
    %563 = vmatpush2.msra.mxu0 0.0
    %564 = vmatprep.subr.mxu0 0.0
    %565 = vmatpush2.msra.mxu0 0.0
    %566 = vmatprep.subr.mxu0 0.0
    %567 = vmatpush2.msra.mxu0 0.0
    %568 = vmatprep.subr.mxu0 0.0
    %569 = vmatpush2.msra.mxu0 0.0
    %570 = vmatprep.subr.mxu0 0.0
    %571 = vmatpush2.msra.mxu0 0.0
    %572 = vmatprep.subr.mxu0 0.0
    %573 = vmatpush2.msra.mxu0 0.0
    %574 = vmatprep.subr.mxu0 0.0
    %575 = vmatpush2.msra.mxu0 0.0
    %576 = vmatprep.subr.mxu0 0.0
    %577 = vmatpush2.msra.mxu0 0.0
    %578 = vmatprep.subr.mxu0 0.0
    %579 = vmatpush2.msra.mxu0 0.0
    %580 = vmatprep.subr.mxu0 0.0
    %581 = vmatpush2.msra.mxu0 0.0
    %582 = vmatprep.subr.mxu0 0.0
    %583 = vmatpush2.msra.mxu0 0.0
    %584 = vmatprep.mubr.f32.mxu0 0.0
    %v585 = vand.u32 %v20, 4294901760
    %586 = vmatmul.mubr.f32.gmra.mxu0 %v585
    %v587 = vpop.f32.mrf.mxu0
    %v588 = vadd.f32 %v469, %v587
    %v589 = vpop.f32.mrf.mxu0
    %590 = vdwg.mxu0
    %591 = vmatprep.subr.mxu0 0.0
    %v592 = vand.u32 %v36, 4294901760
    %593 = vmatpush1.msra.mxu0 %v592
    %594 = vmatprep.subr.mxu0 0.0
    %v595 = vand.u32 %v35, 4294901760
    %596 = vmatpush1.msra.mxu0 %v595
    %597 = vmatprep.subr.mxu0 0.0
    %v598 = vand.u32 %v34, 4294901760
    %599 = vmatpush1.msra.mxu0 %v598
    %600 = vmatprep.subr.mxu0 0.0
    %v601 = vand.u32 %v33, 4294901760
    %602 = vmatpush1.msra.mxu0 %v601
    %603 = vmatprep.subr.mxu0 0.0
    %v604 = vand.u32 %v32, 4294901760
    %605 = vmatpush1.msra.mxu0 %v604
    %606 = vmatprep.subr.mxu0 0.0
    %v607 = vand.u32 %v31, 4294901760
    %608 = vmatpush1.msra.mxu0 %v607
    %609 = vmatprep.subr.mxu0 0.0
    %v610 = vand.u32 %v30, 4294901760
    %611 = vmatpush1.msra.mxu0 %v610
    %612 = vmatprep.subr.mxu0 0.0
    %v613 = vand.u32 %v29, 4294901760
    %614 = vmatpush1.msra.mxu0 %v613
    %615 = vmatprep.subr.mxu0 0.0
    %v616 = vand.u32 %v28, 4294901760
    %617 = vmatpush1.msra.mxu0 %v616
    %618 = vmatprep.subr.mxu0 0.0
    %v619 = vand.u32 %v27, 4294901760
    %620 = vmatpush1.msra.mxu0 %v619
    %621 = vmatprep.subr.mxu0 0.0
    %v622 = vand.u32 %v26, 4294901760
    %623 = vmatpush1.msra.mxu0 %v622
    %624 = vmatprep.subr.mxu0 0.0
    %v625 = vand.u32 %v25, 4294901760
    %626 = vmatpush1.msra.mxu0 %v625
    %627 = vmatprep.subr.mxu0 0.0
    %v628 = vand.u32 %v24, 4294901760
    %629 = vmatpush1.msra.mxu0 %v628
    %630 = vmatprep.subr.mxu0 0.0
    %v631 = vand.u32 %v23, 4294901760
    %632 = vmatpush1.msra.mxu0 %v631
    %633 = vmatprep.subr.mxu0 0.0
    %v634 = vand.u32 %v22, 4294901760
    %635 = vmatpush1.msra.mxu0 %v634
    %636 = vmatprep.subr.mxu0 0.0
    %v637 = vand.u32 %v21, 4294901760
    %638 = vmatpush1.msra.mxu0 %v637
    %639 = vmatprep.subr.mxu0 0.0
    %640 = vmatpush2.msra.mxu0 0.0
    %641 = vmatprep.subr.mxu0 0.0
    %642 = vmatpush2.msra.mxu0 0.0
    %643 = vmatprep.subr.mxu0 0.0
    %644 = vmatpush2.msra.mxu0 0.0
    %645 = vmatprep.subr.mxu0 0.0
    %646 = vmatpush2.msra.mxu0 0.0
    %647 = vmatprep.subr.mxu0 0.0
    %648 = vmatpush2.msra.mxu0 0.0
    %649 = vmatprep.subr.mxu0 0.0
    %650 = vmatpush2.msra.mxu0 0.0
    %651 = vmatprep.subr.mxu0 0.0
    %652 = vmatpush2.msra.mxu0 0.0
    %653 = vmatprep.subr.mxu0 0.0
    %654 = vmatpush2.msra.mxu0 0.0
    %655 = vmatprep.subr.mxu0 0.0
    %656 = vmatpush2.msra.mxu0 0.0
    %657 = vmatprep.subr.mxu0 0.0
    %658 = vmatpush2.msra.mxu0 0.0
    %659 = vmatprep.subr.mxu0 0.0
    %660 = vmatpush2.msra.mxu0 0.0
    %661 = vmatprep.subr.mxu0 0.0
    %662 = vmatpush2.msra.mxu0 0.0
    %663 = vmatprep.subr.mxu0 0.0
    %664 = vmatpush2.msra.mxu0 0.0
    %665 = vmatprep.subr.mxu0 0.0
    %666 = vmatpush2.msra.mxu0 0.0
    %667 = vmatprep.subr.mxu0 0.0
    %668 = vmatpush2.msra.mxu0 0.0
    %669 = vmatprep.subr.mxu0 0.0
    %670 = vmatpush2.msra.mxu0 0.0
    %671 = vmatprep.mubr.f32.mxu0 0.0
    %v672 = vand.u32 %v20, 4294901760
    %673 = vmatmul.mubr.f32.gmra.mxu0 %v672
    %v674 = vpop.f32.mrf.mxu0
    %v675 = vadd.f32 %v588, %v674
    %v676 = vpop.f32.mrf.mxu0
    %677 = vdwg.mxu0
    %678 = vmatprep.subr.mxu0 0.0
    %v679 = vand.u32 %v36, 4294901760
    %680 = vmatpush1.msra.mxu0 %v679
    %681 = vmatprep.subr.mxu0 0.0
    %v682 = vand.u32 %v35, 4294901760
    %683 = vmatpush1.msra.mxu0 %v682
    %684 = vmatprep.subr.mxu0 0.0
    %v685 = vand.u32 %v34, 4294901760
    %686 = vmatpush1.msra.mxu0 %v685
    %687 = vmatprep.subr.mxu0 0.0
    %v688 = vand.u32 %v33, 4294901760
    %689 = vmatpush1.msra.mxu0 %v688
    %690 = vmatprep.subr.mxu0 0.0
    %v691 = vand.u32 %v32, 4294901760
    %692 = vmatpush1.msra.mxu0 %v691
    %693 = vmatprep.subr.mxu0 0.0
    %v694 = vand.u32 %v31, 4294901760
    %695 = vmatpush1.msra.mxu0 %v694
    %696 = vmatprep.subr.mxu0 0.0
    %v697 = vand.u32 %v30, 4294901760
    %698 = vmatpush1.msra.mxu0 %v697
    %699 = vmatprep.subr.mxu0 0.0
    %v700 = vand.u32 %v29, 4294901760
    %701 = vmatpush1.msra.mxu0 %v700
    %702 = vmatprep.subr.mxu0 0.0
    %v703 = vand.u32 %v28, 4294901760
    %704 = vmatpush1.msra.mxu0 %v703
    %705 = vmatprep.subr.mxu0 0.0
    %v706 = vand.u32 %v27, 4294901760
    %707 = vmatpush1.msra.mxu0 %v706
    %708 = vmatprep.subr.mxu0 0.0
    %v709 = vand.u32 %v26, 4294901760
    %710 = vmatpush1.msra.mxu0 %v709
    %711 = vmatprep.subr.mxu0 0.0
    %v712 = vand.u32 %v25, 4294901760
    %713 = vmatpush1.msra.mxu0 %v712
    %714 = vmatprep.subr.mxu0 0.0
    %v715 = vand.u32 %v24, 4294901760
    %716 = vmatpush1.msra.mxu0 %v715
    %717 = vmatprep.subr.mxu0 0.0
    %v718 = vand.u32 %v23, 4294901760
    %719 = vmatpush1.msra.mxu0 %v718
    %720 = vmatprep.subr.mxu0 0.0
    %v721 = vand.u32 %v22, 4294901760
    %722 = vmatpush1.msra.mxu0 %v721
    %723 = vmatprep.subr.mxu0 0.0
    %v724 = vand.u32 %v21, 4294901760
    %725 = vmatpush1.msra.mxu0 %v724
    %726 = vmatprep.subr.mxu0 0.0
    %727 = vmatpush2.msra.mxu0 0.0
    %728 = vmatprep.subr.mxu0 0.0
    %729 = vmatpush2.msra.mxu0 0.0
    %730 = vmatprep.subr.mxu0 0.0
    %731 = vmatpush2.msra.mxu0 0.0
    %732 = vmatprep.subr.mxu0 0.0
    %733 = vmatpush2.msra.mxu0 0.0
    %734 = vmatprep.subr.mxu0 0.0
    %735 = vmatpush2.msra.mxu0 0.0
    %736 = vmatprep.subr.mxu0 0.0
    %737 = vmatpush2.msra.mxu0 0.0
    %738 = vmatprep.subr.mxu0 0.0
    %739 = vmatpush2.msra.mxu0 0.0
    %740 = vmatprep.subr.mxu0 0.0
    %741 = vmatpush2.msra.mxu0 0.0
    %742 = vmatprep.subr.mxu0 0.0
    %743 = vmatpush2.msra.mxu0 0.0
    %744 = vmatprep.subr.mxu0 0.0
    %745 = vmatpush2.msra.mxu0 0.0
    %746 = vmatprep.subr.mxu0 0.0
    %747 = vmatpush2.msra.mxu0 0.0
    %748 = vmatprep.subr.mxu0 0.0
    %749 = vmatpush2.msra.mxu0 0.0
    %750 = vmatprep.subr.mxu0 0.0
    %751 = vmatpush2.msra.mxu0 0.0
    %752 = vmatprep.subr.mxu0 0.0
    %753 = vmatpush2.msra.mxu0 0.0
    %754 = vmatprep.subr.mxu0 0.0
    %755 = vmatpush2.msra.mxu0 0.0
    %756 = vmatprep.subr.mxu0 0.0
    %757 = vmatpush2.msra.mxu0 0.0
    %758 = vmatprep.mubr.f32.mxu0 0.0
    %v759 = vand.u32 %v18, 4294901760
    %v760 = vsub.f32 %v18, %v759
    %v761 = vand.u32 %v760, 4294901760
    %v762 = vsub.f32 %v760, %v761
    %v763 = vand.u32 %v762, 4294901760
    %764 = vmatmul.mubr.f32.gmra.mxu0 %v763
    %v765 = vpop.f32.mrf.mxu0
    %v766 = vadd.f32 16.0, %v765
    %v767 = vpop.f32.mrf.mxu0
    %768 = vdwg.mxu0
    %769 = vmatprep.subr.mxu0 0.0
    %v770 = vand.u32 %v36, 4294901760
    %v771 = vsub.f32 %v36, %v770
    %v772 = vand.u32 %v771, 4294901760
    %v773 = vsub.f32 %v771, %v772
    %v774 = vand.u32 %v773, 4294901760
    %775 = vmatpush1.msra.mxu0 %v774
    %776 = vmatprep.subr.mxu0 0.0
    %v777 = vand.u32 %v35, 4294901760
    %v778 = vsub.f32 %v35, %v777
    %v779 = vand.u32 %v778, 4294901760
    %v780 = vsub.f32 %v778, %v779
    %v781 = vand.u32 %v780, 4294901760
    %782 = vmatpush1.msra.mxu0 %v781
    %783 = vmatprep.subr.mxu0 0.0
    %v784 = vand.u32 %v34, 4294901760
    %v785 = vsub.f32 %v34, %v784
    %v786 = vand.u32 %v785, 4294901760
    %v787 = vsub.f32 %v785, %v786
    %v788 = vand.u32 %v787, 4294901760
    %789 = vmatpush1.msra.mxu0 %v788
    %790 = vmatprep.subr.mxu0 0.0
    %v791 = vand.u32 %v33, 4294901760
    %v792 = vsub.f32 %v33, %v791
    %v793 = vand.u32 %v792, 4294901760
    %v794 = vsub.f32 %v792, %v793
    %v795 = vand.u32 %v794, 4294901760
    %796 = vmatpush1.msra.mxu0 %v795
    %797 = vmatprep.subr.mxu0 0.0
    %v798 = vand.u32 %v32, 4294901760
    %v799 = vsub.f32 %v32, %v798
    %v800 = vand.u32 %v799, 4294901760
    %v801 = vsub.f32 %v799, %v800
    %v802 = vand.u32 %v801, 4294901760
    %803 = vmatpush1.msra.mxu0 %v802
    %804 = vmatprep.subr.mxu0 0.0
    %v805 = vand.u32 %v31, 4294901760
    %v806 = vsub.f32 %v31, %v805
    %v807 = vand.u32 %v806, 4294901760
    %v808 = vsub.f32 %v806, %v807
    %v809 = vand.u32 %v808, 4294901760
    %810 = vmatpush1.msra.mxu0 %v809
    %811 = vmatprep.subr.mxu0 0.0
    %v812 = vand.u32 %v30, 4294901760
    %v813 = vsub.f32 %v30, %v812
    %v814 = vand.u32 %v813, 4294901760
    %v815 = vsub.f32 %v813, %v814
    %v816 = vand.u32 %v815, 4294901760
    %817 = vmatpush1.msra.mxu0 %v816
    %818 = vmatprep.subr.mxu0 0.0
    %v819 = vand.u32 %v29, 4294901760
    %v820 = vsub.f32 %v29, %v819
    %v821 = vand.u32 %v820, 4294901760
    %v822 = vsub.f32 %v820, %v821
    %v823 = vand.u32 %v822, 4294901760
    %824 = vmatpush1.msra.mxu0 %v823
    %825 = vmatprep.subr.mxu0 0.0
    %v826 = vand.u32 %v28, 4294901760
    %v827 = vsub.f32 %v28, %v826
    %v828 = vand.u32 %v827, 4294901760
    %v829 = vsub.f32 %v827, %v828
    %v830 = vand.u32 %v829, 4294901760
    %831 = vmatpush1.msra.mxu0 %v830
    %832 = vmatprep.subr.mxu0 0.0
    %v833 = vand.u32 %v27, 4294901760
    %v834 = vsub.f32 %v27, %v833
    %v835 = vand.u32 %v834, 4294901760
    %v836 = vsub.f32 %v834, %v835
    %v837 = vand.u32 %v836, 4294901760
    %838 = vmatpush1.msra.mxu0 %v837
    %839 = vmatprep.subr.mxu0 0.0
    %v840 = vand.u32 %v26, 4294901760
    %v841 = vsub.f32 %v26, %v840
    %v842 = vand.u32 %v841, 4294901760
    %v843 = vsub.f32 %v841, %v842
    %v844 = vand.u32 %v843, 4294901760
    %845 = vmatpush1.msra.mxu0 %v844
    %846 = vmatprep.subr.mxu0 0.0
    %v847 = vand.u32 %v25, 4294901760
    %v848 = vsub.f32 %v25, %v847
    %v849 = vand.u32 %v848, 4294901760
    %v850 = vsub.f32 %v848, %v849
    %v851 = vand.u32 %v850, 4294901760
    %852 = vmatpush1.msra.mxu0 %v851
    %853 = vmatprep.subr.mxu0 0.0
    %v854 = vand.u32 %v24, 4294901760
    %v855 = vsub.f32 %v24, %v854
    %v856 = vand.u32 %v855, 4294901760
    %v857 = vsub.f32 %v855, %v856
    %v858 = vand.u32 %v857, 4294901760
    %859 = vmatpush1.msra.mxu0 %v858
    %860 = vmatprep.subr.mxu0 0.0
    %v861 = vand.u32 %v23, 4294901760
    %v862 = vsub.f32 %v23, %v861
    %v863 = vand.u32 %v862, 4294901760
    %v864 = vsub.f32 %v862, %v863
    %v865 = vand.u32 %v864, 4294901760
    %866 = vmatpush1.msra.mxu0 %v865
    %867 = vmatprep.subr.mxu0 0.0
    %v868 = vand.u32 %v22, 4294901760
    %v869 = vsub.f32 %v22, %v868
    %v870 = vand.u32 %v869, 4294901760
    %v871 = vsub.f32 %v869, %v870
    %v872 = vand.u32 %v871, 4294901760
    %873 = vmatpush1.msra.mxu0 %v872
    %874 = vmatprep.subr.mxu0 0.0
    %v875 = vand.u32 %v21, 4294901760
    %v876 = vsub.f32 %v21, %v875
    %v877 = vand.u32 %v876, 4294901760
    %v878 = vsub.f32 %v876, %v877
    %v879 = vand.u32 %v878, 4294901760
    %880 = vmatpush1.msra.mxu0 %v879
    %881 = vmatprep.subr.mxu0 0.0
    %882 = vmatpush2.msra.mxu0 0.0
    %883 = vmatprep.subr.mxu0 0.0
    %884 = vmatpush2.msra.mxu0 0.0
    %885 = vmatprep.subr.mxu0 0.0
    %886 = vmatpush2.msra.mxu0 0.0
    %887 = vmatprep.subr.mxu0 0.0
    %888 = vmatpush2.msra.mxu0 0.0
    %889 = vmatprep.subr.mxu0 0.0
    %890 = vmatpush2.msra.mxu0 0.0
    %891 = vmatprep.subr.mxu0 0.0
    %892 = vmatpush2.msra.mxu0 0.0
    %893 = vmatprep.subr.mxu0 0.0
    %894 = vmatpush2.msra.mxu0 0.0
    %895 = vmatprep.subr.mxu0 0.0
    %896 = vmatpush2.msra.mxu0 0.0
    %897 = vmatprep.subr.mxu0 0.0
    %898 = vmatpush2.msra.mxu0 0.0
    %899 = vmatprep.subr.mxu0 0.0
    %900 = vmatpush2.msra.mxu0 0.0
    %901 = vmatprep.subr.mxu0 0.0
    %902 = vmatpush2.msra.mxu0 0.0
    %903 = vmatprep.subr.mxu0 0.0
    %904 = vmatpush2.msra.mxu0 0.0
    %905 = vmatprep.subr.mxu0 0.0
    %906 = vmatpush2.msra.mxu0 0.0
    %907 = vmatprep.subr.mxu0 0.0
    %908 = vmatpush2.msra.mxu0 0.0
    %909 = vmatprep.subr.mxu0 0.0
    %910 = vmatpush2.msra.mxu0 0.0
    %911 = vmatprep.subr.mxu0 0.0
    %912 = vmatpush2.msra.mxu0 0.0
    %913 = vmatprep.mubr.f32.mxu0 0.0
    %v914 = vand.u32 %v18, 4294901760
    %915 = vmatmul.mubr.f32.gmra.mxu0 %v914
    %v916 = vpop.f32.mrf.mxu0
    %v917 = vadd.f32 %v766, %v916
    %v918 = vpop.f32.mrf.mxu0
    %919 = vdwg.mxu0
    %920 = vmatprep.subr.mxu0 0.0
    %v921 = vand.u32 %v36, 4294901760
    %v922 = vsub.f32 %v36, %v921
    %923 = vmatpush1.msra.mxu0 %v922
    %924 = vmatprep.subr.mxu0 0.0
    %v925 = vand.u32 %v35, 4294901760
    %v926 = vsub.f32 %v35, %v925
    %927 = vmatpush1.msra.mxu0 %v926
    %928 = vmatprep.subr.mxu0 0.0
    %v929 = vand.u32 %v34, 4294901760
    %v930 = vsub.f32 %v34, %v929
    %931 = vmatpush1.msra.mxu0 %v930
    %932 = vmatprep.subr.mxu0 0.0
    %v933 = vand.u32 %v33, 4294901760
    %v934 = vsub.f32 %v33, %v933
    %935 = vmatpush1.msra.mxu0 %v934
    %936 = vmatprep.subr.mxu0 0.0
    %v937 = vand.u32 %v32, 4294901760
    %v938 = vsub.f32 %v32, %v937
    %939 = vmatpush1.msra.mxu0 %v938
    %940 = vmatprep.subr.mxu0 0.0
    %v941 = vand.u32 %v31, 4294901760
    %v942 = vsub.f32 %v31, %v941
    %943 = vmatpush1.msra.mxu0 %v942
    %944 = vmatprep.subr.mxu0 0.0
    %v945 = vand.u32 %v30, 4294901760
    %v946 = vsub.f32 %v30, %v945
    %947 = vmatpush1.msra.mxu0 %v946
    %948 = vmatprep.subr.mxu0 0.0
    %v949 = vand.u32 %v29, 4294901760
    %v950 = vsub.f32 %v29, %v949
    %951 = vmatpush1.msra.mxu0 %v950
    %952 = vmatprep.subr.mxu0 0.0
    %v953 = vand.u32 %v28, 4294901760
    %v954 = vsub.f32 %v28, %v953
    %955 = vmatpush1.msra.mxu0 %v954
    %956 = vmatprep.subr.mxu0 0.0
    %v957 = vand.u32 %v27, 4294901760
    %v958 = vsub.f32 %v27, %v957
    %959 = vmatpush1.msra.mxu0 %v958
    %960 = vmatprep.subr.mxu0 0.0
    %v961 = vand.u32 %v26, 4294901760
    %v962 = vsub.f32 %v26, %v961
    %963 = vmatpush1.msra.mxu0 %v962
    %964 = vmatprep.subr.mxu0 0.0
    %v965 = vand.u32 %v25, 4294901760
    %v966 = vsub.f32 %v25, %v965
    %967 = vmatpush1.msra.mxu0 %v966
    %968 = vmatprep.subr.mxu0 0.0
    %v969 = vand.u32 %v24, 4294901760
    %v970 = vsub.f32 %v24, %v969
    %971 = vmatpush1.msra.mxu0 %v970
    %972 = vmatprep.subr.mxu0 0.0
    %v973 = vand.u32 %v23, 4294901760
    %v974 = vsub.f32 %v23, %v973
    %975 = vmatpush1.msra.mxu0 %v974
    %976 = vmatprep.subr.mxu0 0.0
    %v977 = vand.u32 %v22, 4294901760
    %v978 = vsub.f32 %v22, %v977
    %979 = vmatpush1.msra.mxu0 %v978
    %980 = vmatprep.subr.mxu0 0.0
    %v981 = vand.u32 %v21, 4294901760
    %v982 = vsub.f32 %v21, %v981
    %983 = vmatpush1.msra.mxu0 %v982
    %984 = vmatprep.subr.mxu0 0.0
    %985 = vmatpush2.msra.mxu0 0.0
    %986 = vmatprep.subr.mxu0 0.0
    %987 = vmatpush2.msra.mxu0 0.0
    %988 = vmatprep.subr.mxu0 0.0
    %989 = vmatpush2.msra.mxu0 0.0
    %990 = vmatprep.subr.mxu0 0.0
    %991 = vmatpush2.msra.mxu0 0.0
    %992 = vmatprep.subr.mxu0 0.0
    %993 = vmatpush2.msra.mxu0 0.0
    %994 = vmatprep.subr.mxu0 0.0
    %995 = vmatpush2.msra.mxu0 0.0
    %996 = vmatprep.subr.mxu0 0.0
    %997 = vmatpush2.msra.mxu0 0.0
    %998 = vmatprep.subr.mxu0 0.0
    %999 = vmatpush2.msra.mxu0 0.0
    %1000 = vmatprep.subr.mxu0 0.0
    %1001 = vmatpush2.msra.mxu0 0.0
    %1002 = vmatprep.subr.mxu0 0.0
    %1003 = vmatpush2.msra.mxu0 0.0
    %1004 = vmatprep.subr.mxu0 0.0
    %1005 = vmatpush2.msra.mxu0 0.0
    %1006 = vmatprep.subr.mxu0 0.0
    %1007 = vmatpush2.msra.mxu0 0.0
    %1008 = vmatprep.subr.mxu0 0.0
    %1009 = vmatpush2.msra.mxu0 0.0
    %1010 = vmatprep.subr.mxu0 0.0
    %1011 = vmatpush2.msra.mxu0 0.0
    %1012 = vmatprep.subr.mxu0 0.0
    %1013 = vmatpush2.msra.mxu0 0.0
    %1014 = vmatprep.subr.mxu0 0.0
    %1015 = vmatpush2.msra.mxu0 0.0
    %1016 = vmatprep.mubr.f32.mxu0 0.0
    %v1017 = vand.u32 %v18, 4294901760
    %v1018 = vsub.f32 %v18, %v1017
    %1019 = vmatmul.mubr.f32.gmra.mxu0 %v1018
    %v1020 = vpop.f32.mrf.mxu0
    %v1021 = vadd.f32 %v917, %v1020
    %v1022 = vpop.f32.mrf.mxu0
    %1023 = vdwg.mxu0
    %1024 = vmatprep.subr.mxu0 0.0
    %v1025 = vand.u32 %v36, 4294901760
    %1026 = vmatpush1.msra.mxu0 %v1025
    %1027 = vmatprep.subr.mxu0 0.0
    %v1028 = vand.u32 %v35, 4294901760
    %1029 = vmatpush1.msra.mxu0 %v1028
    %1030 = vmatprep.subr.mxu0 0.0
    %v1031 = vand.u32 %v34, 4294901760
    %1032 = vmatpush1.msra.mxu0 %v1031
    %1033 = vmatprep.subr.mxu0 0.0
    %v1034 = vand.u32 %v33, 4294901760
    %1035 = vmatpush1.msra.mxu0 %v1034
    %1036 = vmatprep.subr.mxu0 0.0
    %v1037 = vand.u32 %v32, 4294901760
    %1038 = vmatpush1.msra.mxu0 %v1037
    %1039 = vmatprep.subr.mxu0 0.0
    %v1040 = vand.u32 %v31, 4294901760
    %1041 = vmatpush1.msra.mxu0 %v1040
    %1042 = vmatprep.subr.mxu0 0.0
    %v1043 = vand.u32 %v30, 4294901760
    %1044 = vmatpush1.msra.mxu0 %v1043
    %1045 = vmatprep.subr.mxu0 0.0
    %v1046 = vand.u32 %v29, 4294901760
    %1047 = vmatpush1.msra.mxu0 %v1046
    %1048 = vmatprep.subr.mxu0 0.0
    %v1049 = vand.u32 %v28, 4294901760
    %1050 = vmatpush1.msra.mxu0 %v1049
    %1051 = vmatprep.subr.mxu0 0.0
    %v1052 = vand.u32 %v27, 4294901760
    %1053 = vmatpush1.msra.mxu0 %v1052
    %1054 = vmatprep.subr.mxu0 0.0
    %v1055 = vand.u32 %v26, 4294901760
    %1056 = vmatpush1.msra.mxu0 %v1055
    %1057 = vmatprep.subr.mxu0 0.0
    %v1058 = vand.u32 %v25, 4294901760
    %1059 = vmatpush1.msra.mxu0 %v1058
    %1060 = vmatprep.subr.mxu0 0.0
    %v1061 = vand.u32 %v24, 4294901760
    %1062 = vmatpush1.msra.mxu0 %v1061
    %1063 = vmatprep.subr.mxu0 0.0
    %v1064 = vand.u32 %v23, 4294901760
    %1065 = vmatpush1.msra.mxu0 %v1064
    %1066 = vmatprep.subr.mxu0 0.0
    %v1067 = vand.u32 %v22, 4294901760
    %1068 = vmatpush1.msra.mxu0 %v1067
    %1069 = vmatprep.subr.mxu0 0.0
    %v1070 = vand.u32 %v21, 4294901760
    %1071 = vmatpush1.msra.mxu0 %v1070
    %1072 = vmatprep.subr.mxu0 0.0
    %1073 = vmatpush2.msra.mxu0 0.0
    %1074 = vmatprep.subr.mxu0 0.0
    %1075 = vmatpush2.msra.mxu0 0.0
    %1076 = vmatprep.subr.mxu0 0.0
    %1077 = vmatpush2.msra.mxu0 0.0
    %1078 = vmatprep.subr.mxu0 0.0
    %1079 = vmatpush2.msra.mxu0 0.0
    %1080 = vmatprep.subr.mxu0 0.0
    %1081 = vmatpush2.msra.mxu0 0.0
    %1082 = vmatprep.subr.mxu0 0.0
    %1083 = vmatpush2.msra.mxu0 0.0
    %1084 = vmatprep.subr.mxu0 0.0
    %1085 = vmatpush2.msra.mxu0 0.0
    %1086 = vmatprep.subr.mxu0 0.0
    %1087 = vmatpush2.msra.mxu0 0.0
    %1088 = vmatprep.subr.mxu0 0.0
    %1089 = vmatpush2.msra.mxu0 0.0
    %1090 = vmatprep.subr.mxu0 0.0
    %1091 = vmatpush2.msra.mxu0 0.0
    %1092 = vmatprep.subr.mxu0 0.0
    %1093 = vmatpush2.msra.mxu0 0.0
    %1094 = vmatprep.subr.mxu0 0.0
    %1095 = vmatpush2.msra.mxu0 0.0
    %1096 = vmatprep.subr.mxu0 0.0
    %1097 = vmatpush2.msra.mxu0 0.0
    %1098 = vmatprep.subr.mxu0 0.0
    %1099 = vmatpush2.msra.mxu0 0.0
    %1100 = vmatprep.subr.mxu0 0.0
    %1101 = vmatpush2.msra.mxu0 0.0
    %1102 = vmatprep.subr.mxu0 0.0
    %1103 = vmatpush2.msra.mxu0 0.0
    %1104 = vmatprep.mubr.f32.mxu0 0.0
    %v1105 = vand.u32 %v18, 4294901760
    %v1106 = vsub.f32 %v18, %v1105
    %v1107 = vand.u32 %v1106, 4294901760
    %1108 = vmatmul.mubr.f32.gmra.mxu0 %v1107
    %v1109 = vpop.f32.mrf.mxu0
    %v1110 = vadd.f32 %v1021, %v1109
    %v1111 = vpop.f32.mrf.mxu0
    %1112 = vdwg.mxu0
    %1113 = vmatprep.subr.mxu0 0.0
    %v1114 = vand.u32 %v36, 4294901760
    %v1115 = vsub.f32 %v36, %v1114
    %v1116 = vand.u32 %v1115, 4294901760
    %1117 = vmatpush1.msra.mxu0 %v1116
    %1118 = vmatprep.subr.mxu0 0.0
    %v1119 = vand.u32 %v35, 4294901760
    %v1120 = vsub.f32 %v35, %v1119
    %v1121 = vand.u32 %v1120, 4294901760
    %1122 = vmatpush1.msra.mxu0 %v1121
    %1123 = vmatprep.subr.mxu0 0.0
    %v1124 = vand.u32 %v34, 4294901760
    %v1125 = vsub.f32 %v34, %v1124
    %v1126 = vand.u32 %v1125, 4294901760
    %1127 = vmatpush1.msra.mxu0 %v1126
    %1128 = vmatprep.subr.mxu0 0.0
    %v1129 = vand.u32 %v33, 4294901760
    %v1130 = vsub.f32 %v33, %v1129
    %v1131 = vand.u32 %v1130, 4294901760
    %1132 = vmatpush1.msra.mxu0 %v1131
    %1133 = vmatprep.subr.mxu0 0.0
    %v1134 = vand.u32 %v32, 4294901760
    %v1135 = vsub.f32 %v32, %v1134
    %v1136 = vand.u32 %v1135, 4294901760
    %1137 = vmatpush1.msra.mxu0 %v1136
    %1138 = vmatprep.subr.mxu0 0.0
    %v1139 = vand.u32 %v31, 4294901760
    %v1140 = vsub.f32 %v31, %v1139
    %v1141 = vand.u32 %v1140, 4294901760
    %1142 = vmatpush1.msra.mxu0 %v1141
    %1143 = vmatprep.subr.mxu0 0.0
    %v1144 = vand.u32 %v30, 4294901760
    %v1145 = vsub.f32 %v30, %v1144
    %v1146 = vand.u32 %v1145, 4294901760
    %1147 = vmatpush1.msra.mxu0 %v1146
    %1148 = vmatprep.subr.mxu0 0.0
    %v1149 = vand.u32 %v29, 4294901760
    %v1150 = vsub.f32 %v29, %v1149
    %v1151 = vand.u32 %v1150, 4294901760
    %1152 = vmatpush1.msra.mxu0 %v1151
    %1153 = vmatprep.subr.mxu0 0.0
    %v1154 = vand.u32 %v28, 4294901760
    %v1155 = vsub.f32 %v28, %v1154
    %v1156 = vand.u32 %v1155, 4294901760
    %1157 = vmatpush1.msra.mxu0 %v1156
    %1158 = vmatprep.subr.mxu0 0.0
    %v1159 = vand.u32 %v27, 4294901760
    %v1160 = vsub.f32 %v27, %v1159
    %v1161 = vand.u32 %v1160, 4294901760
    %1162 = vmatpush1.msra.mxu0 %v1161
    %1163 = vmatprep.subr.mxu0 0.0
    %v1164 = vand.u32 %v26, 4294901760
    %v1165 = vsub.f32 %v26, %v1164
    %v1166 = vand.u32 %v1165, 4294901760
    %1167 = vmatpush1.msra.mxu0 %v1166
    %1168 = vmatprep.subr.mxu0 0.0
    %v1169 = vand.u32 %v25, 4294901760
    %v1170 = vsub.f32 %v25, %v1169
    %v1171 = vand.u32 %v1170, 4294901760
    %1172 = vmatpush1.msra.mxu0 %v1171
    %1173 = vmatprep.subr.mxu0 0.0
    %v1174 = vand.u32 %v24, 4294901760
    %v1175 = vsub.f32 %v24, %v1174
    %v1176 = vand.u32 %v1175, 4294901760
    %1177 = vmatpush1.msra.mxu0 %v1176
    %1178 = vmatprep.subr.mxu0 0.0
    %v1179 = vand.u32 %v23, 4294901760
    %v1180 = vsub.f32 %v23, %v1179
    %v1181 = vand.u32 %v1180, 4294901760
    %1182 = vmatpush1.msra.mxu0 %v1181
    %1183 = vmatprep.subr.mxu0 0.0
    %v1184 = vand.u32 %v22, 4294901760
    %v1185 = vsub.f32 %v22, %v1184
    %v1186 = vand.u32 %v1185, 4294901760
    %1187 = vmatpush1.msra.mxu0 %v1186
    %1188 = vmatprep.subr.mxu0 0.0
    %v1189 = vand.u32 %v21, 4294901760
    %v1190 = vsub.f32 %v21, %v1189
    %v1191 = vand.u32 %v1190, 4294901760
    %1192 = vmatpush1.msra.mxu0 %v1191
    %1193 = vmatprep.subr.mxu0 0.0
    %1194 = vmatpush2.msra.mxu0 0.0
    %1195 = vmatprep.subr.mxu0 0.0
    %1196 = vmatpush2.msra.mxu0 0.0
    %1197 = vmatprep.subr.mxu0 0.0
    %1198 = vmatpush2.msra.mxu0 0.0
    %1199 = vmatprep.subr.mxu0 0.0
    %1200 = vmatpush2.msra.mxu0 0.0
    %1201 = vmatprep.subr.mxu0 0.0
    %1202 = vmatpush2.msra.mxu0 0.0
    %1203 = vmatprep.subr.mxu0 0.0
    %1204 = vmatpush2.msra.mxu0 0.0
    %1205 = vmatprep.subr.mxu0 0.0
    %1206 = vmatpush2.msra.mxu0 0.0
    %1207 = vmatprep.subr.mxu0 0.0
    %1208 = vmatpush2.msra.mxu0 0.0
    %1209 = vmatprep.subr.mxu0 0.0
    %1210 = vmatpush2.msra.mxu0 0.0
    %1211 = vmatprep.subr.mxu0 0.0
    %1212 = vmatpush2.msra.mxu0 0.0
    %1213 = vmatprep.subr.mxu0 0.0
    %1214 = vmatpush2.msra.mxu0 0.0
    %1215 = vmatprep.subr.mxu0 0.0
    %1216 = vmatpush2.msra.mxu0 0.0
    %1217 = vmatprep.subr.mxu0 0.0
    %1218 = vmatpush2.msra.mxu0 0.0
    %1219 = vmatprep.subr.mxu0 0.0
    %1220 = vmatpush2.msra.mxu0 0.0
    %1221 = vmatprep.subr.mxu0 0.0
    %1222 = vmatpush2.msra.mxu0 0.0
    %1223 = vmatprep.subr.mxu0 0.0
    %1224 = vmatpush2.msra.mxu0 0.0
    %1225 = vmatprep.mubr.f32.mxu0 0.0
    %v1226 = vand.u32 %v18, 4294901760
    %1227 = vmatmul.mubr.f32.gmra.mxu0 %v1226
    %v1228 = vpop.f32.mrf.mxu0
    %v1229 = vadd.f32 %v1110, %v1228
    %v1230 = vpop.f32.mrf.mxu0
    %1231 = vdwg.mxu0
    %1232 = vmatprep.subr.mxu0 0.0
    %v1233 = vand.u32 %v36, 4294901760
    %1234 = vmatpush1.msra.mxu0 %v1233
    %1235 = vmatprep.subr.mxu0 0.0
    %v1236 = vand.u32 %v35, 4294901760
    %1237 = vmatpush1.msra.mxu0 %v1236
    %1238 = vmatprep.subr.mxu0 0.0
    %v1239 = vand.u32 %v34, 4294901760
    %1240 = vmatpush1.msra.mxu0 %v1239
    %1241 = vmatprep.subr.mxu0 0.0
    %v1242 = vand.u32 %v33, 4294901760
    %1243 = vmatpush1.msra.mxu0 %v1242
    %1244 = vmatprep.subr.mxu0 0.0
    %v1245 = vand.u32 %v32, 4294901760
    %1246 = vmatpush1.msra.mxu0 %v1245
    %1247 = vmatprep.subr.mxu0 0.0
    %v1248 = vand.u32 %v31, 4294901760
    %1249 = vmatpush1.msra.mxu0 %v1248
    %1250 = vmatprep.subr.mxu0 0.0
    %v1251 = vand.u32 %v30, 4294901760
    %1252 = vmatpush1.msra.mxu0 %v1251
    %1253 = vmatprep.subr.mxu0 0.0
    %v1254 = vand.u32 %v29, 4294901760
    %1255 = vmatpush1.msra.mxu0 %v1254
    %1256 = vmatprep.subr.mxu0 0.0
    %v1257 = vand.u32 %v28, 4294901760
    %1258 = vmatpush1.msra.mxu0 %v1257
    %1259 = vmatprep.subr.mxu0 0.0
    %v1260 = vand.u32 %v27, 4294901760
    %1261 = vmatpush1.msra.mxu0 %v1260
    %1262 = vmatprep.subr.mxu0 0.0
    %v1263 = vand.u32 %v26, 4294901760
    %1264 = vmatpush1.msra.mxu0 %v1263
    %1265 = vmatprep.subr.mxu0 0.0
    %v1266 = vand.u32 %v25, 4294901760
    %1267 = vmatpush1.msra.mxu0 %v1266
    %1268 = vmatprep.subr.mxu0 0.0
    %v1269 = vand.u32 %v24, 4294901760
    %1270 = vmatpush1.msra.mxu0 %v1269
    %1271 = vmatprep.subr.mxu0 0.0
    %v1272 = vand.u32 %v23, 4294901760
    %1273 = vmatpush1.msra.mxu0 %v1272
    %1274 = vmatprep.subr.mxu0 0.0
    %v1275 = vand.u32 %v22, 4294901760
    %1276 = vmatpush1.msra.mxu0 %v1275
    %1277 = vmatprep.subr.mxu0 0.0
    %v1278 = vand.u32 %v21, 4294901760
    %1279 = vmatpush1.msra.mxu0 %v1278
    %1280 = vmatprep.subr.mxu0 0.0
    %1281 = vmatpush2.msra.mxu0 0.0
    %1282 = vmatprep.subr.mxu0 0.0
    %1283 = vmatpush2.msra.mxu0 0.0
    %1284 = vmatprep.subr.mxu0 0.0
    %1285 = vmatpush2.msra.mxu0 0.0
    %1286 = vmatprep.subr.mxu0 0.0
    %1287 = vmatpush2.msra.mxu0 0.0
    %1288 = vmatprep.subr.mxu0 0.0
    %1289 = vmatpush2.msra.mxu0 0.0
    %1290 = vmatprep.subr.mxu0 0.0
    %1291 = vmatpush2.msra.mxu0 0.0
    %1292 = vmatprep.subr.mxu0 0.0
    %1293 = vmatpush2.msra.mxu0 0.0
    %1294 = vmatprep.subr.mxu0 0.0
    %1295 = vmatpush2.msra.mxu0 0.0
    %1296 = vmatprep.subr.mxu0 0.0
    %1297 = vmatpush2.msra.mxu0 0.0
    %1298 = vmatprep.subr.mxu0 0.0
    %1299 = vmatpush2.msra.mxu0 0.0
    %1300 = vmatprep.subr.mxu0 0.0
    %1301 = vmatpush2.msra.mxu0 0.0
    %1302 = vmatprep.subr.mxu0 0.0
    %1303 = vmatpush2.msra.mxu0 0.0
    %1304 = vmatprep.subr.mxu0 0.0
    %1305 = vmatpush2.msra.mxu0 0.0
    %1306 = vmatprep.subr.mxu0 0.0
    %1307 = vmatpush2.msra.mxu0 0.0
    %1308 = vmatprep.subr.mxu0 0.0
    %1309 = vmatpush2.msra.mxu0 0.0
    %1310 = vmatprep.subr.mxu0 0.0
    %1311 = vmatpush2.msra.mxu0 0.0
    %1312 = vmatprep.mubr.f32.mxu0 0.0
    %v1313 = vand.u32 %v18, 4294901760
    %1314 = vmatmul.mubr.f32.gmra.mxu0 %v1313
    %v1315 = vpop.f32.mrf.mxu0
    %v1316 = vadd.f32 %v1229, %v1315
    %v1317 = vpop.f32.mrf.mxu0
    %1318 = vdwg.mxu0
    %v1319 = vrcp.pop %v1316
    %v1320 = vmul.f32 %v675, %v1319
    %v1321 = vsub.f32 1.0, %v1320
    %vm1322 = vcmask 64512
    %1323 = vst.msk [vmem:[#allocation2] sm:$0xff] %vm1322, %v1321
    // Predicated region
    $region14: #{tpu_custom_call.1} parent=1 // pred_check
      _
    $region15: #{tpu_custom_call.1} parent=1 // pred_check_branch
      %1325 = sbr.rel (0) target = $region17
    $region16: #{tpu_custom_call.1} parent=1 // pred_region
      %s1327 = ssub.s32 128, 16
      %1328 = vsyncadd [#allocation3], %s1327
      %s1329 = sshll.u32 [#allocation2], 4
      %s1330 = int_to_ptr.vmem [resolvable:$true] %s1329
      %1335 = dma.vmem_to_hbm [thread:$0]  %s1330, 16, %s3, [#allocation3], 16, 16, 1
    $region17: #{tpu_custom_call.1} parent=1 // pred_fallthru
      _
    // Predicated region
    $region18: #{tpu_custom_call.1} parent=1 // pred_check
      _
    $region19: #{tpu_custom_call.1} parent=1 // pred_check_branch
      %1337 = sbr.rel (0) target = $region21
    $region20: #{tpu_custom_call.1} parent=1 // pred_region
      %1338 = dma.done [#allocation3], 128
    $region21: #{tpu_custom_call.1} parent=1 // pred_fallthru
      _
    %1339 = vsyncpa [#allocation3], 1

</llo_original>
